<compile_context>
chip_gen: v5e
topology: v5e:2x2
jax: 0.10.0
libtpu: 0.0.40
codegen_flags: <defaults>
</compile_context>

<pallas_src>
import jax
import jax.numpy as jnp
from jax import lax
from jax.experimental import pallas as pl
from jax.experimental.pallas import tpu as pltpu

# ----------------------------- config -----------------------------
B, C_IN, H, W = 2, 4, 16, 16          # input (NCHW in the public API)
C_OUT = 8                             # conv output channels
KH = KW = 3                           # 3x3 conv, padding=1, stride=1
N_CLASSES = 10
HW = H * W                            # 256 (lane-dense spatial axis)
FEAT = C_OUT * HW                     # 2048 flattened features (NCHW order)
KTAP = KH * KW * B * C_IN             # 72 rows of the im2col^T matrix
PAD = W + 1                           # zero margin covering any 3x3 tap offset


# -------------------- fused kernel: conv+ReLU+flatten+linear --------------------
def fused_kernel(xs_ref, wbig_ref, cb_ref, fcw_ref, fcb_ref, out_ref,
                 xpad_scr, conv_scr, feat_scr):
    # xs_ref  : (B*C_IN, HW)        input planes, row = b*C_IN + ci, lane = h*W + w
    # wbig_ref: (B*C_OUT, KTAP)     block-diagonal conv weight, row = co*B + b
    # cb_ref  : (B*C_OUT, 1)        conv bias per (co, b) row
    # fcw_ref : (N_CLASSES, FEAT)   PyTorch-native Linear weight (out, in)
    # fcb_ref : (1, N_CLASSES)
    # out_ref : (B, N_CLASSES)

    # 1) in-kernel zero padding: flat planes with a zero margin on both sides
    #    (margin absorbs all vertical/top-bottom 3x3 tap offsets automatically)
    xpad_scr[...] = jnp.zeros(xpad_scr.shape, xpad_scr.dtype)
    xpad_scr[:, pl.ds(PAD, HW)] = xs_ref[...]

    # 2) horizontal validity masks (kill row-to-row wrap of the +/-1 lane shifts);
    #    computed once, reused for all kh taps (VPU work, off the MXU critical path)
    col = lax.broadcasted_iota(jnp.int32, (B * C_IN, HW), 1) % W
    left_ok = col >= 1            # output column w may read w-1
    right_ok = col <= W - 2       # output column w may read w+1

    # 3) im2col^T: 9 shifted planes stacked on sublanes -> (KTAP, HW)
    pieces = []
    for kh in range(KH):
        for kw in range(KW):
            off = (kh - 1) * W + (kw - 1)                 # static flat tap offset
            s = xpad_scr[:, pl.ds(PAD + off, HW)]         # (B*C_IN, HW)
            if kw == 0:
                s = jnp.where(left_ok, s, 0.0)
            elif kw == 2:
                s = jnp.where(right_ok, s, 0.0)
            pieces.append(s)
    s_mat = jnp.concatenate(pieces, axis=0)               # (72, 256)

    # 4) conv as a single MXU dot, + bias, ReLU; rows ordered (co, b), lanes = h*W+w
    conv = jnp.dot(wbig_ref[...], s_mat, preferred_element_type=jnp.float32)
    conv_scr[...] = jnp.maximum(conv + cb_ref[...], 0.0)  # (B*C_OUT, HW)

    # 5) repack lane-dense into PyTorch flatten order: feat[b, co*HW + p]
    #    (lane-aligned 256-wide writes; 16 KB total, negligible)
    for co in range(C_OUT):
        feat_scr[:, co * HW:(co + 1) * HW] = conv_scr[co * B:(co + 1) * B, :]

    # 6) classifier: (B, FEAT) contracted with (N_CLASSES, FEAT) over FEAT
    logits = lax.dot_general(
        feat_scr[...], fcw_ref[...],
        dimension_numbers=(((1,), (1,)), ((), ())),
        preferred_element_type=jnp.float32)               # (B, N_CLASSES)
    out_ref[...] = logits + fcb_ref[...]


def fused_forward(xs, w_big, cb_rows, fc_w, fc_b_row):
    return pl.pallas_call(
        fused_kernel,
        out_shape=jax.ShapeDtypeStruct((B, N_CLASSES), jnp.float32),
        grid_spec=pltpu.PrefetchScalarGridSpec(
            num_scalar_prefetch=0,
            grid=(1,),
            in_specs=[
                pl.BlockSpec((B * C_IN, HW), lambda i: (0, 0)),
                pl.BlockSpec((B * C_OUT, KTAP), lambda i: (0, 0)),
                pl.BlockSpec((B * C_OUT, 1), lambda i: (0, 0)),
                pl.BlockSpec((N_CLASSES, FEAT), lambda i: (0, 0)),
                pl.BlockSpec((1, N_CLASSES), lambda i: (0, 0)),
            ],
            out_specs=pl.BlockSpec((B, N_CLASSES), lambda i: (0, 0)),
            scratch_shapes=[
                pltpu.VMEM((B * C_IN, HW + 2 * PAD), jnp.float32),  # padded input
                pltpu.VMEM((B * C_OUT, HW), jnp.float32),           # conv output
                pltpu.VMEM((B, FEAT), jnp.float32),                 # flat features
            ],
        ),
        compiler_params=pltpu.CompilerParams(
            dimension_semantics=("arbitrary",)),
    )(xs, w_big, cb_rows, fc_w, fc_b_row)


# -------------------- parameter prep (weight-side, one-time) --------------------
def prepare_params(conv_w, conv_b, fc_w, fc_b):
    """conv_w: (C_OUT, C_IN, KH, KW) PyTorch OIHW; conv_b: (C_OUT,);
    fc_w: (N_CLASSES, FEAT) PyTorch (out, in); fc_b: (N_CLASSES,)."""
    # W_big[co*B + b, kk*(B*C_IN) + b2*C_IN + ci] = conv_w[co, ci, kh, kw] * (b == b2)
    w_k = jnp.transpose(conv_w, (0, 2, 3, 1)).reshape(C_OUT, KH * KW, C_IN)  # [co, kk, ci]
    eye_b = jnp.eye(B, dtype=conv_w.dtype)
    w_big = jnp.einsum('okc,bd->obkdc', w_k, eye_b).reshape(B * C_OUT, KTAP)
    cb_rows = jnp.repeat(conv_b, B).reshape(B * C_OUT, 1)                    # row = co*B + b
    return w_big, cb_rows, fc_w, fc_b.reshape(1, N_CLASSES)


def my_model_forward(x_nchw, prepared):
    """x_nchw: (B, C_IN, H, W) float32 -> (B, N_CLASSES) float32."""
    w_big, cb_rows, fc_w, fc_b_row = prepared
    xs = x_nchw.reshape(B * C_IN, HW)      # contiguous reshape, no data movement
    return fused_forward(xs, w_big, cb_rows, fc_w, fc_b_row)


# ----------------------------- pure-JAX reference -----------------------------
def reference_forward(x, conv_w, conv_b, fc_w, fc_b):
    y = lax.conv_general_dilated(
        x, conv_w, window_strides=(1, 1), padding=((1, 1), (1, 1)),
        dimension_numbers=("NCHW", "OIHW", "NCHW"))
    y = jnp.maximum(y + conv_b.reshape(1, C_OUT, 1, 1), 0.0)
    return y.reshape(B, FEAT) @ fc_w.T + fc_b


if __name__ == "__main__":
    key = jax.random.PRNGKey(0)
    kx, k1, k2, k3, k4 = jax.random.split(key, 5)
    x = jax.random.normal(kx, (B, C_IN, H, W), jnp.float32)
    conv_w = jax.random.normal(k1, (C_OUT, C_IN, KH, KW), jnp.float32) * 0.1
    conv_b = jax.random.normal(k2, (C_OUT,), jnp.float32) * 0.1
    fc_w = jax.random.normal(k3, (N_CLASSES, FEAT), jnp.float32) * 0.02
    fc_b = jax.random.normal(k4, (N_CLASSES,), jnp.float32) * 0.02

    prepared = prepare_params(conv_w, conv_b, fc_w, fc_b)
    forward = jax.jit(my_model_forward)

    out = forward(x, prepared)
    out = jax.block_until_ready(out)
    assert out.shape == (B, N_CLASSES) and out.dtype == jnp.float32

    ref = reference_forward(x, conv_w, conv_b, fc_w, fc_b)
    ref = jax.block_until_ready(ref)
    assert jnp.allclose(out, ref, atol=5e-2, rtol=5e-2)

    print("KERNEL_OK")
</pallas_src>

<mosaic_0001>
module attributes {stable_mosaic.version = 11 : i64} {
  func.func @fused_kernel(%arg0: i32, %arg1: memref<8x256xf32, #tpu.memory_space<vmem>>, %arg2: memref<16x72xf32, #tpu.memory_space<vmem>>, %arg3: memref<16x1xf32, #tpu.memory_space<vmem>>, %arg4: memref<10x2048xf32, #tpu.memory_space<vmem>>, %arg5: memref<1x10xf32, #tpu.memory_space<vmem>>, %arg6: memref<2x10xf32, #tpu.memory_space<vmem>>, %arg7: memref<8x290xf32, #tpu.memory_space<vmem>>, %arg8: memref<16x256xf32, #tpu.memory_space<vmem>>, %arg9: memref<2x2048xf32, #tpu.memory_space<vmem>>) attributes {dimension_semantics = [#tpu.dimension_semantics<arbitrary>], iteration_bounds = array<i64: 1>, scalar_prefetch = 0 : i64, scratch_operands = 3 : i64, tpu.core_type = #tpu.core_type<tc>, window_params = [{pipeline_mode = #tpu.pipeline_mode<synchronous>, transform_indices = @transform_0, window_bounds = array<i64: 8, 256>}, {pipeline_mode = #tpu.pipeline_mode<synchronous>, transform_indices = @transform_1, window_bounds = array<i64: 16, 72>}, {pipeline_mode = #tpu.pipeline_mode<synchronous>, transform_indices = @transform_2, window_bounds = array<i64: 16, 1>}, {pipeline_mode = #tpu.pipeline_mode<synchronous>, transform_indices = @transform_3, window_bounds = array<i64: 10, 2048>}, {pipeline_mode = #tpu.pipeline_mode<synchronous>, transform_indices = @transform_4, window_bounds = array<i64: 1, 10>}, {pipeline_mode = #tpu.pipeline_mode<synchronous>, transform_indices = @transform_5, window_bounds = array<i64: 2, 10>}]} {
    %cst = arith.constant 0.000000e+00 : f32
    %0 = vector.broadcast %cst : f32 to vector<8x290xf32>
    %c0 = arith.constant 0 : index
    %c0_0 = arith.constant 0 : index
    %1 = vector.load %arg7[%c0, %c0_0] : memref<8x290xf32, #tpu.memory_space<vmem>>, vector<8x290xf32>
    tpu.vector_store %arg7[%c0, %c0_0], %0 {strides = array<i32>} : memref<8x290xf32, #tpu.memory_space<vmem>>, vector<8x290xf32>,
    %c0_1 = arith.constant 0 : index
    %c0_2 = arith.constant 0 : index
    %2 = vector.load %arg1[%c0_1, %c0_2] : memref<8x256xf32, #tpu.memory_space<vmem>>, vector<8x256xf32>
    %c0_3 = arith.constant 0 : index
    %c17 = arith.constant 17 : index
    %3 = vector.load %arg7[%c0_3, %c17] : memref<8x290xf32, #tpu.memory_space<vmem>>, vector<8x256xf32>
    tpu.vector_store %arg7[%c0_3, %c17], %2 {strides = array<i32>} : memref<8x290xf32, #tpu.memory_space<vmem>>, vector<8x256xf32>,
    %4 = tpu.iota {dimensions = array<i32: 1>} : vector<8x256xi32>
    %c16_i32 = arith.constant 16 : i32
    %c0_i32 = arith.constant 0 : i32
    %5 = arith.cmpi eq, %c16_i32, %c0_i32 : i32
    %c1_i32 = arith.constant 1 : i32
    %6 = arith.select %5, %c1_i32, %c16_i32 : i32
    %7 = vector.broadcast %6 : i32 to vector<8x256xi32>
    %8 = arith.remsi %4, %7 : vector<8x256xi32>
    %c0_i32_4 = arith.constant 0 : i32
    %9 = vector.broadcast %c0_i32_4 : i32 to vector<8x256xi32>
    %10 = arith.cmpi ne, %8, %9 : vector<8x256xi32>
    %c0_i32_5 = arith.constant 0 : i32
    %11 = vector.broadcast %c0_i32_5 : i32 to vector<8x256xi32>
    %12 = arith.cmpi slt, %8, %11 : vector<8x256xi32>
    %c0_i32_6 = arith.constant 0 : i32
    %13 = arith.cmpi slt, %6, %c0_i32_6 : i32
    %14 = vector.broadcast %13 : i1 to vector<8x256xi1>
    %15 = vector.broadcast %14 : vector<8x256xi1> to vector<8x256xi1>
    %16 = arith.xori %12, %15 : vector<8x256xi1>
    %17 = arith.andi %16, %10 : vector<8x256xi1>
    %18 = vector.broadcast %6 : i32 to vector<8x256xi32>
    %19 = arith.addi %8, %18 : vector<8x256xi32>
    %20 = arith.select %17, %19, %8 : vector<8x256xi1>, vector<8x256xi32>
    %c1_i32_7 = arith.constant 1 : i32
    %21 = vector.broadcast %c1_i32_7 : i32 to vector<8x256xi32>
    %22 = arith.cmpi sge, %20, %21 : vector<8x256xi32>
    %c14_i32 = arith.constant 14 : i32
    %23 = vector.broadcast %c14_i32 : i32 to vector<8x256xi32>
    %24 = arith.cmpi sle, %20, %23 : vector<8x256xi32>
    %c0_8 = arith.constant 0 : index
    %c0_9 = arith.constant 0 : index
    %25 = vector.load %arg7[%c0_8, %c0_9] : memref<8x290xf32, #tpu.memory_space<vmem>>, vector<8x256xf32>
    %cst_10 = arith.constant 0.000000e+00 : f32
    %26 = vector.broadcast %cst_10 : f32 to vector<8x256xf32>
    %27 = arith.select %22, %25, %26 : vector<8x256xi1>, vector<8x256xf32>
    %c0_11 = arith.constant 0 : index
    %c1 = arith.constant 1 : index
    %28 = vector.load %arg7[%c0_11, %c1] : memref<8x290xf32, #tpu.memory_space<vmem>>, vector<8x256xf32>
    %c0_12 = arith.constant 0 : index
    %c2 = arith.constant 2 : index
    %29 = vector.load %arg7[%c0_12, %c2] : memref<8x290xf32, #tpu.memory_space<vmem>>, vector<8x256xf32>
    %cst_13 = arith.constant 0.000000e+00 : f32
    %30 = vector.broadcast %cst_13 : f32 to vector<8x256xf32>
    %31 = arith.select %24, %29, %30 : vector<8x256xi1>, vector<8x256xf32>
    %c0_14 = arith.constant 0 : index
    %c16 = arith.constant 16 : index
    %32 = vector.load %arg7[%c0_14, %c16] : memref<8x290xf32, #tpu.memory_space<vmem>>, vector<8x256xf32>
    %cst_15 = arith.constant 0.000000e+00 : f32
    %33 = vector.broadcast %cst_15 : f32 to vector<8x256xf32>
    %34 = arith.select %22, %32, %33 : vector<8x256xi1>, vector<8x256xf32>
    %c0_16 = arith.constant 0 : index
    %c17_17 = arith.constant 17 : index
    %35 = vector.load %arg7[%c0_16, %c17_17] : memref<8x290xf32, #tpu.memory_space<vmem>>, vector<8x256xf32>
    %c0_18 = arith.constant 0 : index
    %c18 = arith.constant 18 : index
    %36 = vector.load %arg7[%c0_18, %c18] : memref<8x290xf32, #tpu.memory_space<vmem>>, vector<8x256xf32>
    %cst_19 = arith.constant 0.000000e+00 : f32
    %37 = vector.broadcast %cst_19 : f32 to vector<8x256xf32>
    %38 = arith.select %24, %36, %37 : vector<8x256xi1>, vector<8x256xf32>
    %c0_20 = arith.constant 0 : index
    %c32 = arith.constant 32 : index
    %39 = vector.load %arg7[%c0_20, %c32] : memref<8x290xf32, #tpu.memory_space<vmem>>, vector<8x256xf32>
    %cst_21 = arith.constant 0.000000e+00 : f32
    %40 = vector.broadcast %cst_21 : f32 to vector<8x256xf32>
    %41 = arith.select %22, %39, %40 : vector<8x256xi1>, vector<8x256xf32>
    %c0_22 = arith.constant 0 : index
    %c33 = arith.constant 33 : index
    %42 = vector.load %arg7[%c0_22, %c33] : memref<8x290xf32, #tpu.memory_space<vmem>>, vector<8x256xf32>
    %c0_23 = arith.constant 0 : index
    %c34 = arith.constant 34 : index
    %43 = vector.load %arg7[%c0_23, %c34] : memref<8x290xf32, #tpu.memory_space<vmem>>, vector<8x256xf32>
    %cst_24 = arith.constant 0.000000e+00 : f32
    %44 = vector.broadcast %cst_24 : f32 to vector<8x256xf32>
    %45 = arith.select %24, %43, %44 : vector<8x256xi1>, vector<8x256xf32>
    %46 = tpu.concatenate %27, %28, %31, %34, %35, %38, %41, %42, %45 in 0 : vector<8x256xf32>, vector<8x256xf32>, vector<8x256xf32>, vector<8x256xf32>, vector<8x256xf32>, vector<8x256xf32>, vector<8x256xf32>, vector<8x256xf32>, vector<8x256xf32> -> vector<72x256xf32>
    %c0_25 = arith.constant 0 : index
    %c0_26 = arith.constant 0 : index
    %47 = vector.load %arg2[%c0_25, %c0_26] : memref<16x72xf32, #tpu.memory_space<vmem>>, vector<16x72xf32>
    %cst_27 = arith.constant dense<0.000000e+00> : vector<16x256xf32>
    %48 = tpu.matmul %47, %46, %cst_27 {dimension_numbers = #tpu.dot_dimension_numbers<[1], [0], [0], [1], [0, 0, 1, 1], [], []>} : vector<16x72xf32>, vector<72x256xf32>, vector<16x256xf32> -> vector<16x256xf32>
    %c0_28 = arith.constant 0 : index
    %c0_29 = arith.constant 0 : index
    %49 = vector.load %arg3[%c0_28, %c0_29] : memref<16x1xf32, #tpu.memory_space<vmem>>, vector<16x1xf32>
    %50 = vector.broadcast %49 : vector<16x1xf32> to vector<16x256xf32>
    %51 = arith.addf %48, %50 : vector<16x256xf32>
    %cst_30 = arith.constant 0.000000e+00 : f32
    %52 = vector.broadcast %cst_30 : f32 to vector<16x256xf32>
    %53 = arith.maximumf %51, %52 : vector<16x256xf32>
    %c0_31 = arith.constant 0 : index
    %c0_32 = arith.constant 0 : index
    %54 = vector.load %arg8[%c0_31, %c0_32] : memref<16x256xf32, #tpu.memory_space<vmem>>, vector<16x256xf32>
    tpu.vector_store %arg8[%c0_31, %c0_32], %53 {strides = array<i32>} : memref<16x256xf32, #tpu.memory_space<vmem>>, vector<16x256xf32>,
    %c0_33 = arith.constant 0 : index
    %c0_34 = arith.constant 0 : index
    %55 = vector.load %arg8[%c0_33, %c0_34] : memref<16x256xf32, #tpu.memory_space<vmem>>, vector<2x256xf32>
    %c0_35 = arith.constant 0 : index
    %c0_36 = arith.constant 0 : index
    %56 = vector.load %arg9[%c0_35, %c0_36] : memref<2x2048xf32, #tpu.memory_space<vmem>>, vector<2x256xf32>
    tpu.vector_store %arg9[%c0_35, %c0_36], %55 {strides = array<i32>} : memref<2x2048xf32, #tpu.memory_space<vmem>>, vector<2x256xf32>,
    %c2_37 = arith.constant 2 : index
    %c0_38 = arith.constant 0 : index
    %57 = vector.load %arg8[%c2_37, %c0_38] : memref<16x256xf32, #tpu.memory_space<vmem>>, vector<2x256xf32>
    %c0_39 = arith.constant 0 : index
    %c256 = arith.constant 256 : index
    %58 = vector.load %arg9[%c0_39, %c256] : memref<2x2048xf32, #tpu.memory_space<vmem>>, vector<2x256xf32>
    tpu.vector_store %arg9[%c0_39, %c256], %57 {strides = array<i32>} : memref<2x2048xf32, #tpu.memory_space<vmem>>, vector<2x256xf32>,
    %c4 = arith.constant 4 : index
    %c0_40 = arith.constant 0 : index
    %59 = vector.load %arg8[%c4, %c0_40] : memref<16x256xf32, #tpu.memory_space<vmem>>, vector<2x256xf32>
    %c0_41 = arith.constant 0 : index
    %c512 = arith.constant 512 : index
    %60 = vector.load %arg9[%c0_41, %c512] : memref<2x2048xf32, #tpu.memory_space<vmem>>, vector<2x256xf32>
    tpu.vector_store %arg9[%c0_41, %c512], %59 {strides = array<i32>} : memref<2x2048xf32, #tpu.memory_space<vmem>>, vector<2x256xf32>,
    %c6 = arith.constant 6 : index
    %c0_42 = arith.constant 0 : index
    %61 = vector.load %arg8[%c6, %c0_42] : memref<16x256xf32, #tpu.memory_space<vmem>>, vector<2x256xf32>
    %c0_43 = arith.constant 0 : index
    %c768 = arith.constant 768 : index
    %62 = vector.load %arg9[%c0_43, %c768] : memref<2x2048xf32, #tpu.memory_space<vmem>>, vector<2x256xf32>
    tpu.vector_store %arg9[%c0_43, %c768], %61 {strides = array<i32>} : memref<2x2048xf32, #tpu.memory_space<vmem>>, vector<2x256xf32>,
    %c8 = arith.constant 8 : index
    %c0_44 = arith.constant 0 : index
    %63 = vector.load %arg8[%c8, %c0_44] : memref<16x256xf32, #tpu.memory_space<vmem>>, vector<2x256xf32>
    %c0_45 = arith.constant 0 : index
    %c1024 = arith.constant 1024 : index
    %64 = vector.load %arg9[%c0_45, %c1024] : memref<2x2048xf32, #tpu.memory_space<vmem>>, vector<2x256xf32>
    tpu.vector_store %arg9[%c0_45, %c1024], %63 {strides = array<i32>} : memref<2x2048xf32, #tpu.memory_space<vmem>>, vector<2x256xf32>,
    %c10 = arith.constant 10 : index
    %c0_46 = arith.constant 0 : index
    %65 = vector.load %arg8[%c10, %c0_46] : memref<16x256xf32, #tpu.memory_space<vmem>>, vector<2x256xf32>
    %c0_47 = arith.constant 0 : index
    %c1280 = arith.constant 1280 : index
    %66 = vector.load %arg9[%c0_47, %c1280] : memref<2x2048xf32, #tpu.memory_space<vmem>>, vector<2x256xf32>
    tpu.vector_store %arg9[%c0_47, %c1280], %65 {strides = array<i32>} : memref<2x2048xf32, #tpu.memory_space<vmem>>, vector<2x256xf32>,
    %c12 = arith.constant 12 : index
    %c0_48 = arith.constant 0 : index
    %67 = vector.load %arg8[%c12, %c0_48] : memref<16x256xf32, #tpu.memory_space<vmem>>, vector<2x256xf32>
    %c0_49 = arith.constant 0 : index
    %c1536 = arith.constant 1536 : index
    %68 = vector.load %arg9[%c0_49, %c1536] : memref<2x2048xf32, #tpu.memory_space<vmem>>, vector<2x256xf32>
    tpu.vector_store %arg9[%c0_49, %c1536], %67 {strides = array<i32>} : memref<2x2048xf32, #tpu.memory_space<vmem>>, vector<2x256xf32>,
    %c14 = arith.constant 14 : index
    %c0_50 = arith.constant 0 : index
    %69 = vector.load %arg8[%c14, %c0_50] : memref<16x256xf32, #tpu.memory_space<vmem>>, vector<2x256xf32>
    %c0_51 = arith.constant 0 : index
    %c1792 = arith.constant 1792 : index
    %70 = vector.load %arg9[%c0_51, %c1792] : memref<2x2048xf32, #tpu.memory_space<vmem>>, vector<2x256xf32>
    tpu.vector_store %arg9[%c0_51, %c1792], %69 {strides = array<i32>} : memref<2x2048xf32, #tpu.memory_space<vmem>>, vector<2x256xf32>,
    %c0_52 = arith.constant 0 : index
    %c0_53 = arith.constant 0 : index
    %71 = vector.load %arg9[%c0_52, %c0_53] : memref<2x2048xf32, #tpu.memory_space<vmem>>, vector<2x2048xf32>
    %c0_54 = arith.constant 0 : index
    %c0_55 = arith.constant 0 : index
    %72 = vector.load %arg4[%c0_54, %c0_55] : memref<10x2048xf32, #tpu.memory_space<vmem>>, vector<10x2048xf32>
    %cst_56 = arith.constant dense<0.000000e+00> : vector<2x10xf32>
    %73 = tpu.matmul %71, %72, %cst_56 {dimension_numbers = #tpu.dot_dimension_numbers<[1], [1], [0], [0], [0, 0, 1, 0], [], []>} : vector<2x2048xf32>, vector<10x2048xf32>, vector<2x10xf32> -> vector<2x10xf32>
    %c0_57 = arith.constant 0 : index
    %c0_58 = arith.constant 0 : index
    %74 = vector.load %arg5[%c0_57, %c0_58] : memref<1x10xf32, #tpu.memory_space<vmem>>, vector<1x10xf32>
    %75 = vector.broadcast %74 : vector<1x10xf32> to vector<2x10xf32>
    %76 = arith.addf %73, %75 : vector<2x10xf32>
    %c0_59 = arith.constant 0 : index
    %c0_60 = arith.constant 0 : index
    %77 = vector.load %arg6[%c0_59, %c0_60] : memref<2x10xf32, #tpu.memory_space<vmem>>, vector<2x10xf32>
    tpu.vector_store %arg6[%c0_59, %c0_60], %76 {strides = array<i32>} : memref<2x10xf32, #tpu.memory_space<vmem>>, vector<2x10xf32>,
    return
  }
  func.func @transform_0(%arg0: i32) -> (i32, i32) {
    %c0_i32 = arith.constant 0 : i32
    %c0_i32_0 = arith.constant 0 : i32
    %c0_i32_1 = arith.constant 0 : i32
    return %c0_i32, %c0_i32_0 : i32, i32
  }
  func.func @transform_1(%arg0: i32) -> (i32, i32) {
    %c0_i32 = arith.constant 0 : i32
    %c0_i32_0 = arith.constant 0 : i32
    %c0_i32_1 = arith.constant 0 : i32
    return %c0_i32, %c0_i32_0 : i32, i32
  }
  func.func @transform_2(%arg0: i32) -> (i32, i32) {
    %c0_i32 = arith.constant 0 : i32
    %c0_i32_0 = arith.constant 0 : i32
    %c0_i32_1 = arith.constant 0 : i32
    return %c0_i32, %c0_i32_0 : i32, i32
  }
  func.func @transform_3(%arg0: i32) -> (i32, i32) {
    %c0_i32 = arith.constant 0 : i32
    %c0_i32_0 = arith.constant 0 : i32
    %c0_i32_1 = arith.constant 0 : i32
    return %c0_i32, %c0_i32_0 : i32, i32
  }
  func.func @transform_4(%arg0: i32) -> (i32, i32) {
    %c0_i32 = arith.constant 0 : i32
    %c0_i32_0 = arith.constant 0 : i32
    %c0_i32_1 = arith.constant 0 : i32
    return %c0_i32, %c0_i32_0 : i32, i32
  }
  func.func @transform_5(%arg0: i32) -> (i32, i32) {
    %c0_i32 = arith.constant 0 : i32
    %c0_i32_0 = arith.constant 0 : i32
    %c0_i32_1 = arith.constant 0 : i32
    return %c0_i32, %c0_i32_0 : i32, i32
  }
}

</mosaic_0001>

<llo_original>
// kernel: my_model_forward.1
$region0: #{my_model_forward.1}
  #allocation0 [shape = 'u32[]', space=smem, size = 0x4, offset = 0x4, fixed_abs, tag = 'smem constant byte address 0x4 - core index']
  #allocation1 [shape = 'u32[72,128]{1,0:T(1,128)}', space=vmem, size = 0x9000, scoped, tag = 'internal scratch']
  #allocation2 [shape = 'f32[8,290]{1,0:T(8,128)}', space=vmem, size = 0x3000, scoped, tag = 'scratch operand']
  #allocation3 [shape = 'f32[16,256]{1,0:T(8,128)}', space=vmem, size = 0x4000, scoped, tag = 'scratch operand']
  #allocation4 [shape = 'f32[2,2048]{1,0:T(2,128)}', space=vmem, size = 0x4000, scoped, tag = 'scratch operand']
  %s0 = inlined_call_operand.vmem [shape: f32[8,256], index: 0, kind: input, shape index: {}]
  %s1 = inlined_call_operand.vmem [shape: f32[16,72], index: 1, kind: input, shape index: {}]
  %s2 = inlined_call_operand.vmem [shape: f32[16,1], index: 2, kind: input, shape index: {}]
  %s3 = inlined_call_operand.hbm [shape: f32[10,2048], index: 3, kind: input, shape index: {}]
  %s4 = inlined_call_operand.vmem [shape: f32[1,10], index: 4, kind: input, shape index: {}]
  %s5 = inlined_call_operand.hbm [shape: f32[2,10], index: 5, kind: output, shape index: {}]
  %s6 = sld [smem:[#allocation0]]
  $region34: #{my_model_forward.1} parent=0
    _
  %s8 = ssub.s32 1, %s6
  %s9 = scalar_select 0, %s8, %s6
  $region1: #{my_model_forward.1} parent=0
    #allocation5 [shape = 'u8[131072]{0}', space=vmem, size = 0x20000, scoped, tag = 'input window, operand 3, single buffered']
    #allocation6 [shape = 's32[1]{0}', space=sflag, size = 0x4, scoped, tag = 'scoped memory for my_model_forward.1']
    #allocation7 [shape = 's32[1]{0}', space=sflag, size = 0x4, scoped, tag = 'scoped memory for my_model_forward.1']
    #allocation8 [shape = 'u8[1024]{0}', space=vmem, size = 0x400, scoped, tag = 'output window, operand 0, single buffered']
    %10 = vsyncpa [#allocation6], 0
    %11 = vsyncpa [#allocation7], 0
    // Predicated region
    $region2: #{my_model_forward.1} parent=1 // pred_check
      _
    $region3: #{my_model_forward.1} parent=1 // pred_check_branch
      %13 = sbr.rel (0) target = $region5
    $region4: #{my_model_forward.1} parent=1 // pred_region
      _
    $region5: #{my_model_forward.1} parent=1 // pred_fallthru
      _
    // Predicated region
    $region6: #{my_model_forward.1} parent=1 // pred_check
      _
    $region7: #{my_model_forward.1} parent=1 // pred_check_branch
      %15 = sbr.rel (0) target = $region9
    $region8: #{my_model_forward.1} parent=1 // pred_region
      _
    $region9: #{my_model_forward.1} parent=1 // pred_fallthru
      _
    // Predicated region
    $region10: #{my_model_forward.1} parent=1 // pred_check
      _
    $region11: #{my_model_forward.1} parent=1 // pred_check_branch
      %17 = sbr.rel (0) target = $region13
    $region12: #{my_model_forward.1} parent=1 // pred_region
      _
    $region13: #{my_model_forward.1} parent=1 // pred_fallthru
      _
    // Predicated region
    $region14: #{my_model_forward.1} parent=1 // pred_check
      _
    $region15: #{my_model_forward.1} parent=1 // pred_check_branch
      %19 = sbr.rel (0) target = $region17
    $region16: #{my_model_forward.1} parent=1 // pred_region
      %21 = vsyncadd [#allocation6], 0
      %s22 = sshll.u32 %s3, 4
      %s23 = int_to_ptr.hbm [resolvable:$true] %s22
      %s24 = sshll.u32 [#allocation5], 4
      %s25 = int_to_ptr.vmem [resolvable:$true] %s24
      %30 = dma.hbm_to_vmem [thread:$0]  %s23, 4096, %s25, [#allocation6], 2048, 2048, 128
    $region17: #{my_model_forward.1} parent=1 // pred_fallthru
      _
    // Predicated region
    $region18: #{my_model_forward.1} parent=1 // pred_check
      _
    $region19: #{my_model_forward.1} parent=1 // pred_check_branch
      %32 = sbr.rel (0) target = $region21
    $region20: #{my_model_forward.1} parent=1 // pred_region
      _
    $region21: #{my_model_forward.1} parent=1 // pred_fallthru
      _
    // Predicated region
    $region22: #{my_model_forward.1} parent=1 // pred_check
      _
    $region23: #{my_model_forward.1} parent=1 // pred_check_branch
      %34 = sbr.rel (0) target = $region25
    $region24: #{my_model_forward.1} parent=1 // pred_region
      %36 = dma.done [#allocation6], 4096
    $region25: #{my_model_forward.1} parent=1 // pred_fallthru
      _
    %37 = vst [vmem:[#allocation2] sm:$0xff] 0.0
    %38 = vst [vmem:[#allocation2 + $0x8] sm:$0xff] 0.0
    %vm39 = vcmask 277504
    %40 = vst.msk [vmem:[#allocation2 + $0x10] sm:$0xff] %vm39, 0.0
    %v41 = vld [vmem:[%s0] sm:$0xff]
    %v42 = vld [vmem:[%s0 + $0x8] sm:$0xff]
    %45 = vrot.lane.b32.xlu0 %v41, 17
    %v46 = vpop.permute.xlu0 %45
    %47 = vrot.lane.b32.xlu0 %v42, 17
    %v48 = vpop.permute.xlu0 %47
    %vm49 = vcmask 138240
    %v50 = vsel %vm49, %v46, %v48
    %vm54 = vcmask 1047688
    %55 = vst.msk [vmem:[#allocation2] sm:$0xff] %vm54, %v46
    %56 = vst [vmem:[#allocation2 + $0x8] sm:$0xff] %v50
    %57 = vst.msk [vmem:[#allocation2 + $0x10] sm:$0xff] %vm49, %v48
    %v58 = vlaneseq
    %v59 = vand.u32 %v58, 127
    %v60 = vadd.s32 %v59, 128
    %vm61 = vcmp.lt.s32.totalorder %v59, 0
    %v62 = vsub.s32 0, %v59
    %v63 = vsel %vm61, %v62, %v59
    %v64 = vshrl.u32 %v63, 4
    %v65 = vand.u32 %v63, 15
    %v66 = vsub.s32 0, %v65
    %v67 = vsel %vm61, %v66, %v65
    %vm68 = vcmp.lt.s32.totalorder %v60, 0
    %v69 = vsub.s32 0, %v60
    %v70 = vsel %vm68, %v69, %v60
    %v71 = vshrl.u32 %v70, 4
    %v72 = vand.u32 %v70, 15
    %v73 = vsub.s32 0, %v72
    %v74 = vsel %vm68, %v73, %v72
    %vm75 = vcmp.ne.s32.totalorder %v67, 0
    %vm76 = vcmp.ne.s32.totalorder %v74, 0
    %vm77 = vcmp.lt.s32.totalorder %v67, 0
    %vm78 = vcmp.lt.s32.totalorder %v74, 0
    %vm79 = vmand %vm77, %vm75
    %vm80 = vmand %vm78, %vm76
    %v81 = vadd.s32 %v67, 16
    %v82 = vadd.s32 %v74, 16
    %v83 = vsel %vm79, %v81, %v67
    %v84 = vsel %vm80, %v82, %v74
    %vm85 = vcmp.ge.s32.totalorder %v83, 1
    %vm86 = vcmp.ge.s32.totalorder %v84, 1
    %vm87 = vcmp.le.s32.totalorder %v83, 14
    %vm88 = vcmp.le.s32.totalorder %v84, 14
    %v89 = vld [vmem:[#allocation2] sm:$0xff]
    %v90 = vld [vmem:[#allocation2 + $0x8] sm:$0xff]
    %v91 = vsel %vm85, %v89, 0.0
    %v92 = vsel %vm86, %v90, 0.0
    %v93 = vld [vmem:[#allocation2 + $0x10] sm:$0xff]
    %97 = vrot.lane.b32.xlu0 %v89, 126
    %v98 = vpop.permute.xlu0 %97
    %99 = vrot.lane.b32.xlu0 %v90, 126
    %v100 = vpop.permute.xlu0 %99
    %101 = vrot.lane.b32.xlu0 %v93, 126
    %v102 = vpop.permute.xlu0 %101
    %vm103 = vcmask 1031168
    %v104 = vsel %vm103, %v98, %v100
    %v105 = vsel %vm103, %v100, %v102
    %v108 = vsel %vm87, %v104, 0.0
    %v109 = vsel %vm88, %v105, 0.0
    %110 = vrot.lane.b32.xlu0 %v89, 112
    %v111 = vpop.permute.xlu0 %110
    %112 = vrot.lane.b32.xlu0 %v90, 112
    %v113 = vpop.permute.xlu0 %112
    %114 = vrot.lane.b32.xlu0 %v93, 112
    %v115 = vpop.permute.xlu0 %114
    %vm116 = vcmask 916480
    %v117 = vsel %vm116, %v111, %v113
    %v118 = vsel %vm116, %v113, %v115
    %v121 = vsel %vm85, %v117, 0.0
    %v122 = vsel %vm86, %v118, 0.0
    %123 = vrot.lane.b32.xlu0 %v89, 110
    %v124 = vpop.permute.xlu0 %123
    %125 = vrot.lane.b32.xlu0 %v90, 110
    %v126 = vpop.permute.xlu0 %125
    %127 = vrot.lane.b32.xlu0 %v93, 110
    %v128 = vpop.permute.xlu0 %127
    %vm129 = vcmask 900096
    %v130 = vsel %vm129, %v124, %v126
    %v131 = vsel %vm129, %v126, %v128
    %v134 = vsel %vm87, %v130, 0.0
    %v135 = vsel %vm88, %v131, 0.0
    %136 = vrot.lane.b32.xlu0 %v89, 96
    %v137 = vpop.permute.xlu0 %136
    %138 = vrot.lane.b32.xlu0 %v90, 96
    %v139 = vpop.permute.xlu0 %138
    %140 = vrot.lane.b32.xlu0 %v93, 96
    %v141 = vpop.permute.xlu0 %140
    %vm142 = vcmask 785408
    %v143 = vsel %vm142, %v137, %v139
    %v144 = vsel %vm142, %v139, %v141
    %v147 = vsel %vm85, %v143, 0.0
    %v148 = vsel %vm86, %v144, 0.0
    %149 = vrot.lane.b32.xlu0 %v89, 94
    %v150 = vpop.permute.xlu0 %149
    %151 = vrot.lane.b32.xlu0 %v90, 94
    %v152 = vpop.permute.xlu0 %151
    %153 = vrot.lane.b32.xlu0 %v93, 94
    %v154 = vpop.permute.xlu0 %153
    %vm155 = vcmask 769024
    %v156 = vsel %vm155, %v150, %v152
    %v157 = vsel %vm155, %v152, %v154
    %v160 = vsel %vm87, %v156, 0.0
    %v161 = vsel %vm88, %v157, 0.0
    %162 = vrot.lane.b32.xlu0 %v89, 127
    %v163 = vpop.permute.xlu0 %162
    %164 = vrot.lane.b32.xlu0 %v90, 127
    %v165 = vpop.permute.xlu0 %164
    %166 = vrot.lane.b32.xlu0 %v93, 127
    %v167 = vpop.permute.xlu0 %166
    %vm168 = vcmask 1039360
    %v169 = vsel %vm168, %v163, %v165
    %v170 = vsel %vm168, %v165, %v167
    %173 = vrot.lane.b32.xlu0 %v89, 111
    %v174 = vpop.permute.xlu0 %173
    %175 = vrot.lane.b32.xlu0 %v90, 111
    %v176 = vpop.permute.xlu0 %175
    %177 = vrot.lane.b32.xlu0 %v93, 111
    %v178 = vpop.permute.xlu0 %177
    %vm179 = vcmask 908288
    %v180 = vsel %vm179, %v174, %v176
    %v181 = vsel %vm179, %v176, %v178
    %184 = vrot.lane.b32.xlu0 %v89, 95
    %v185 = vpop.permute.xlu0 %184
    %186 = vrot.lane.b32.xlu0 %v90, 95
    %v187 = vpop.permute.xlu0 %186
    %188 = vrot.lane.b32.xlu0 %v93, 95
    %v189 = vpop.permute.xlu0 %188
    %vm190 = vcmask 777216
    %v191 = vsel %vm190, %v185, %v187
    %v192 = vsel %vm190, %v187, %v189
    %v195 = vld [vmem:[%s1] sm:$0xff]
    %v196 = vld [vmem:[%s1 + $0x8] sm:$0xff]
    %v197 = vld [vmem:[%s2] sm:$0xff]
    %v198 = vld [vmem:[%s2 + $0x8] sm:$0xff]
    %200 = vset.pattern.permute.xlu0 0
    %201 = vperm.xlu0 %200, %v197
    %v202 = vpop.permute.xlu0 %201
    %205 = vset.pattern.permute.xlu0 0
    %206 = vperm.xlu0 %205, %v198
    %v207 = vpop.permute.xlu0 %206
    %vm209 = vcmask 588800
    %v211 = vsel %vm209, %v195, 0
    %v214 = vsel %vm209, %v196, 0
    %216 = vmatpush.msra.mxu0 0.0
    %217 = vmatpush.msra.mxu0 0.0
    %218 = vmatpush.msra.mxu0 0.0
    %219 = vmatpush.msra.mxu0 0.0
    %220 = vmatpush.msra.mxu0 0.0
    %221 = vmatpush.msra.mxu0 0.0
    %222 = vmatpush.msra.mxu0 0.0
    %223 = vmatpush.msra.mxu0 %v160
    %224 = vmatpush.msra.mxu0 %v191
    %225 = vmatpush.msra.mxu0 %v147
    %226 = vmatpush.msra.mxu0 %v134
    %227 = vmatpush.msra.mxu0 %v180
    %228 = vmatpush.msra.mxu0 %v121
    %229 = vmatpush.msra.mxu0 %v108
    %230 = vmatpush.msra.mxu0 %v169
    %231 = vmatpush.msra.mxu0 %v91
    %232 = vmatmul.f32.gmra.mxu0 %v211
    %v233 = vpop.f32.mrf.mxu0
    %v234 = vadd.f32 %v202, %v233
    %235 = vmatmul.f32.gmra.mxu0 %v214
    %v236 = vpop.f32.mrf.mxu0
    %v237 = vadd.f32 %v207, %v236
    %238 = vdwg.mxu0
    %239 = vmatpush.msra.mxu0 0.0
    %240 = vmatpush.msra.mxu0 0.0
    %241 = vmatpush.msra.mxu0 0.0
    %242 = vmatpush.msra.mxu0 0.0
    %243 = vmatpush.msra.mxu0 0.0
    %244 = vmatpush.msra.mxu0 0.0
    %245 = vmatpush.msra.mxu0 0.0
    %246 = vmatpush.msra.mxu0 %v161
    %247 = vmatpush.msra.mxu0 %v192
    %248 = vmatpush.msra.mxu0 %v148
    %249 = vmatpush.msra.mxu0 %v135
    %250 = vmatpush.msra.mxu0 %v181
    %251 = vmatpush.msra.mxu0 %v122
    %252 = vmatpush.msra.mxu0 %v109
    %253 = vmatpush.msra.mxu0 %v170
    %254 = vmatpush.msra.mxu0 %v92
    %255 = vmatmul.f32.gmra.mxu0 %v211
    %v256 = vpop.f32.mrf.mxu0
    %v257 = vadd.f32 %v202, %v256
    %258 = vmatmul.f32.gmra.mxu0 %v214
    %v259 = vpop.f32.mrf.mxu0
    %v260 = vadd.f32 %v207, %v259
    %261 = vdwg.mxu0
    %v262 = vmax.f32 %v234, 0.0
    %v263 = vmax.f32 %v257, 0.0
    %v264 = vmax.f32 %v237, 0.0
    %v265 = vmax.f32 %v260, 0.0
    %266 = vst [vmem:[#allocation3] sm:$0xff] %v262
    %267 = vst [vmem:[#allocation3 + $0x8] sm:$0xff] %v263
    %268 = vst [vmem:[#allocation3 + $0x10] sm:$0xff] %v264
    %269 = vst [vmem:[#allocation3 + $0x18] sm:$0xff] %v265
    %v270 = vld [vmem:[#allocation3] sm:$0x3]
    %v271 = vld [vmem:[#allocation3 + $0x8] sm:$0x3]
    %v274 = vrot.slane %v271, 6
    %vm275 = vcmask 1041408
    %v276 = vsel %vm275, %v270, %v274
    %278 = vst [vmem:[#allocation4] sm:$0xf] %v276
    %v279 = vld [vmem:[#allocation3] sm:$0xc]
    %v280 = vld [vmem:[#allocation3 + $0x8] sm:$0xc]
    %283 = vst.sshfl [vmem:[#allocation1] sm:$0xff pattern:$0x73625140] %v279
    %284 = vst.sshfl [vmem:[#allocation1 + $0x8] sm:$0xff pattern:$0x73625140] %v280
    %s285 = scalar_lea.vmem [#allocation1], 1
    %v286 = vld [vmem:[%s285] ss:$4 sm:$0xff]
    %288 = vst [vmem:[#allocation4 + $0x4] sm:$0xf] %v286
    %v289 = vld [vmem:[#allocation3] sm:$0x30]
    %v290 = vld [vmem:[#allocation3 + $0x8] sm:$0x30]
    %293 = vst.sshfl [vmem:[#allocation1] sm:$0xff pattern:$0x73625140] %v289
    %294 = vst.sshfl [vmem:[#allocation1 + $0x8] sm:$0xff pattern:$0x73625140] %v290
    %s295 = scalar_lea.vmem [#allocation1], 2
    %v296 = vld [vmem:[%s295] ss:$4 sm:$0xff]
    %298 = vst [vmem:[#allocation4 + $0x8] sm:$0xf] %v296
    %v299 = vld [vmem:[#allocation3] sm:$0xc0]
    %v300 = vld [vmem:[#allocation3 + $0x8] sm:$0xc0]
    %303 = vst.sshfl [vmem:[#allocation1] sm:$0xff pattern:$0x73625140] %v299
    %304 = vst.sshfl [vmem:[#allocation1 + $0x8] sm:$0xff pattern:$0x73625140] %v300
    %s305 = scalar_lea.vmem [#allocation1], 3
    %v306 = vld [vmem:[%s305] ss:$4 sm:$0xff]
    %308 = vst [vmem:[#allocation4 + $0xc] sm:$0xf] %v306
    %v309 = vld [vmem:[#allocation3 + $0x10] sm:$0x3]
    %v310 = vld [vmem:[#allocation3 + $0x18] sm:$0x3]
    %v313 = vrot.slane %v310, 6
    %v314 = vsel %vm275, %v309, %v313
    %316 = vst [vmem:[#allocation4 + $0x10] sm:$0xf] %v314
    %v317 = vld [vmem:[#allocation3 + $0x10] sm:$0xc]
    %v318 = vld [vmem:[#allocation3 + $0x18] sm:$0xc]
    %321 = vst.sshfl [vmem:[#allocation1] sm:$0xff pattern:$0x73625140] %v317
    %322 = vst.sshfl [vmem:[#allocation1 + $0x8] sm:$0xff pattern:$0x73625140] %v318
    %s323 = scalar_lea.vmem [#allocation1], 1
    %v324 = vld [vmem:[%s323] ss:$4 sm:$0xff]
    %326 = vst [vmem:[#allocation4 + $0x14] sm:$0xf] %v324
    %v327 = vld [vmem:[#allocation3 + $0x10] sm:$0x30]
    %v328 = vld [vmem:[#allocation3 + $0x18] sm:$0x30]
    %331 = vst.sshfl [vmem:[#allocation1] sm:$0xff pattern:$0x73625140] %v327
    %332 = vst.sshfl [vmem:[#allocation1 + $0x8] sm:$0xff pattern:$0x73625140] %v328
    %s333 = scalar_lea.vmem [#allocation1], 2
    %v334 = vld [vmem:[%s333] ss:$4 sm:$0xff]
    %336 = vst [vmem:[#allocation4 + $0x18] sm:$0xf] %v334
    %v337 = vld [vmem:[#allocation3 + $0x10] sm:$0xc0]
    %v338 = vld [vmem:[#allocation3 + $0x18] sm:$0xc0]
    %341 = vst.sshfl [vmem:[#allocation1] sm:$0xff pattern:$0x73625140] %v337
    %342 = vst.sshfl [vmem:[#allocation1 + $0x8] sm:$0xff pattern:$0x73625140] %v338
    %s343 = scalar_lea.vmem [#allocation1], 3
    %v344 = vld [vmem:[%s343] ss:$4 sm:$0xff]
    %346 = vst [vmem:[#allocation4 + $0x1c] sm:$0xf] %v344
    %v347 = vld [vmem:[#allocation4] sm:$0xff]
    %v348 = vld [vmem:[#allocation4 + $0x8] sm:$0xff]
    %v349 = vld [vmem:[#allocation4 + $0x10] sm:$0xff]
    %v350 = vld [vmem:[#allocation4 + $0x18] sm:$0xff]
    %v351 = vld [vmem:[#allocation5] sm:$0xff]
    %v352 = vld [vmem:[#allocation5 + $0x8] sm:$0xff]
    %v353 = vld [vmem:[#allocation5 + $0x10] sm:$0xff]
    %v354 = vld [vmem:[#allocation5 + $0x18] sm:$0xff]
    %v355 = vld [vmem:[#allocation5 + $0x20] sm:$0xff]
    %v356 = vld [vmem:[#allocation5 + $0x28] sm:$0xff]
    %v357 = vld [vmem:[#allocation5 + $0x30] sm:$0xff]
    %v358 = vld [vmem:[#allocation5 + $0x38] sm:$0xff]
    %v359 = vld [vmem:[#allocation5 + $0x40] sm:$0xff]
    %v360 = vld [vmem:[#allocation5 + $0x48] sm:$0xff]
    %v361 = vld [vmem:[#allocation5 + $0x50] sm:$0xff]
    %v362 = vld [vmem:[#allocation5 + $0x58] sm:$0xff]
    %v363 = vld [vmem:[#allocation5 + $0x60] sm:$0xff]
    %v364 = vld [vmem:[#allocation5 + $0x68] sm:$0xff]
    %v365 = vld [vmem:[#allocation5 + $0x70] sm:$0xff]
    %v366 = vld [vmem:[#allocation5 + $0x78] sm:$0xff]
    %v367 = vld [vmem:[#allocation5 + $0x80] sm:$0x3]
    %v368 = vld [vmem:[#allocation5 + $0x88] sm:$0x3]
    %v369 = vld [vmem:[#allocation5 + $0x90] sm:$0x3]
    %v370 = vld [vmem:[#allocation5 + $0x98] sm:$0x3]
    %v371 = vld [vmem:[#allocation5 + $0xa0] sm:$0x3]
    %v372 = vld [vmem:[#allocation5 + $0xa8] sm:$0x3]
    %v373 = vld [vmem:[#allocation5 + $0xb0] sm:$0x3]
    %v374 = vld [vmem:[#allocation5 + $0xb8] sm:$0x3]
    %v375 = vld [vmem:[#allocation5 + $0xc0] sm:$0x3]
    %v376 = vld [vmem:[#allocation5 + $0xc8] sm:$0x3]
    %v377 = vld [vmem:[#allocation5 + $0xd0] sm:$0x3]
    %v378 = vld [vmem:[#allocation5 + $0xd8] sm:$0x3]
    %v379 = vld [vmem:[#allocation5 + $0xe0] sm:$0x3]
    %v380 = vld [vmem:[#allocation5 + $0xe8] sm:$0x3]
    %v381 = vld [vmem:[#allocation5 + $0xf0] sm:$0x3]
    %v382 = vld [vmem:[#allocation5 + $0xf8] sm:$0x3]
    %v383 = vld [vmem:[%s4] sm:$0x1]
    %v385 = vperm.slane %v383, 0
    %391 = vst [vmem:[#allocation1] ss:$4 sm:$0xff] %v347
    %s392 = scalar_lea.vmem [#allocation1], 32
    %393 = vst [vmem:[%s392] ss:$4 sm:$0xff] %v348
    %v394 = vld.sshfl [vmem:[#allocation1] sm:$0xff pattern:$0x73625140]
    %v395 = vld.sshfl [vmem:[#allocation1 + $0x8] sm:$0xff pattern:$0x73625140]
    %v396 = vld.sshfl [vmem:[#allocation1 + $0x10] sm:$0xff pattern:$0x73625140]
    %v397 = vld.sshfl [vmem:[#allocation1 + $0x18] sm:$0xff pattern:$0x73625140]
    %v398 = vld.sshfl [vmem:[#allocation1 + $0x20] sm:$0xff pattern:$0x73625140]
    %v399 = vld.sshfl [vmem:[#allocation1 + $0x28] sm:$0xff pattern:$0x73625140]
    %v400 = vld.sshfl [vmem:[#allocation1 + $0x30] sm:$0xff pattern:$0x73625140]
    %v401 = vld.sshfl [vmem:[#allocation1 + $0x38] sm:$0xff pattern:$0x73625140]
    %402 = vst [vmem:[#allocation1] ss:$4 sm:$0xff] %v349
    %403 = vst [vmem:[%s392] ss:$4 sm:$0xff] %v350
    %v404 = vld.sshfl [vmem:[#allocation1] sm:$0xff pattern:$0x73625140]
    %v405 = vld.sshfl [vmem:[#allocation1 + $0x8] sm:$0xff pattern:$0x73625140]
    %v406 = vld.sshfl [vmem:[#allocation1 + $0x10] sm:$0xff pattern:$0x73625140]
    %v407 = vld.sshfl [vmem:[#allocation1 + $0x18] sm:$0xff pattern:$0x73625140]
    %v408 = vld.sshfl [vmem:[#allocation1 + $0x20] sm:$0xff pattern:$0x73625140]
    %v409 = vld.sshfl [vmem:[#allocation1 + $0x28] sm:$0xff pattern:$0x73625140]
    %v410 = vld.sshfl [vmem:[#allocation1 + $0x30] sm:$0xff pattern:$0x73625140]
    %v411 = vld.sshfl [vmem:[#allocation1 + $0x38] sm:$0xff pattern:$0x73625140]
    %428 = vmatpush.xpose.msra.mxu0 0.0
    %429 = vmatpush.xpose.msra.mxu0 0.0
    %430 = vmatpush.xpose.msra.mxu0 0.0
    %431 = vmatpush.xpose.msra.mxu0 0.0
    %432 = vmatpush.xpose.msra.mxu0 0.0
    %433 = vmatpush.xpose.msra.mxu0 0.0
    %434 = vmatpush.xpose.msra.mxu0 0.0
    %435 = vmatpush.xpose.msra.mxu0 0.0
    %436 = vmatpush.xpose.msra.mxu0 0.0
    %437 = vmatpush.xpose.msra.mxu0 0.0
    %438 = vmatpush.xpose.msra.mxu0 0.0
    %439 = vmatpush.xpose.msra.mxu0 0.0
    %440 = vmatpush.xpose.msra.mxu0 0.0
    %441 = vmatpush.xpose.msra.mxu0 0.0
    %442 = vmatpush.xpose.msra.mxu0 %v367
    %443 = vmatpush.xpose.msra.mxu0 %v351
    %444 = vmatmul.f32.gmra.mxu0 %v394
    %v445 = vpop.f32.mrf.mxu0
    %v446 = vadd.f32 %v385, %v445
    %447 = vdwg.mxu0
    %448 = vmatpush.xpose.msra.mxu0 0.0
    %449 = vmatpush.xpose.msra.mxu0 0.0
    %450 = vmatpush.xpose.msra.mxu0 0.0
    %451 = vmatpush.xpose.msra.mxu0 0.0
    %452 = vmatpush.xpose.msra.mxu0 0.0
    %453 = vmatpush.xpose.msra.mxu0 0.0
    %454 = vmatpush.xpose.msra.mxu0 0.0
    %455 = vmatpush.xpose.msra.mxu0 0.0
    %456 = vmatpush.xpose.msra.mxu0 0.0
    %457 = vmatpush.xpose.msra.mxu0 0.0
    %458 = vmatpush.xpose.msra.mxu0 0.0
    %459 = vmatpush.xpose.msra.mxu0 0.0
    %460 = vmatpush.xpose.msra.mxu0 0.0
    %461 = vmatpush.xpose.msra.mxu0 0.0
    %462 = vmatpush.xpose.msra.mxu0 %v368
    %463 = vmatpush.xpose.msra.mxu0 %v352
    %464 = vmatmul.f32.gmra.mxu0 %v395
    %v465 = vpop.f32.mrf.mxu0
    %v466 = vadd.f32 %v446, %v465
    %467 = vdwg.mxu0
    %468 = vmatpush.xpose.msra.mxu0 0.0
    %469 = vmatpush.xpose.msra.mxu0 0.0
    %470 = vmatpush.xpose.msra.mxu0 0.0
    %471 = vmatpush.xpose.msra.mxu0 0.0
    %472 = vmatpush.xpose.msra.mxu0 0.0
    %473 = vmatpush.xpose.msra.mxu0 0.0
    %474 = vmatpush.xpose.msra.mxu0 0.0
    %475 = vmatpush.xpose.msra.mxu0 0.0
    %476 = vmatpush.xpose.msra.mxu0 0.0
    %477 = vmatpush.xpose.msra.mxu0 0.0
    %478 = vmatpush.xpose.msra.mxu0 0.0
    %479 = vmatpush.xpose.msra.mxu0 0.0
    %480 = vmatpush.xpose.msra.mxu0 0.0
    %481 = vmatpush.xpose.msra.mxu0 0.0
    %482 = vmatpush.xpose.msra.mxu0 %v369
    %483 = vmatpush.xpose.msra.mxu0 %v353
    %484 = vmatmul.f32.gmra.mxu0 %v396
    %v485 = vpop.f32.mrf.mxu0
    %v486 = vadd.f32 %v466, %v485
    %487 = vdwg.mxu0
    %488 = vmatpush.xpose.msra.mxu0 0.0
    %489 = vmatpush.xpose.msra.mxu0 0.0
    %490 = vmatpush.xpose.msra.mxu0 0.0
    %491 = vmatpush.xpose.msra.mxu0 0.0
    %492 = vmatpush.xpose.msra.mxu0 0.0
    %493 = vmatpush.xpose.msra.mxu0 0.0
    %494 = vmatpush.xpose.msra.mxu0 0.0
    %495 = vmatpush.xpose.msra.mxu0 0.0
    %496 = vmatpush.xpose.msra.mxu0 0.0
    %497 = vmatpush.xpose.msra.mxu0 0.0
    %498 = vmatpush.xpose.msra.mxu0 0.0
    %499 = vmatpush.xpose.msra.mxu0 0.0
    %500 = vmatpush.xpose.msra.mxu0 0.0
    %501 = vmatpush.xpose.msra.mxu0 0.0
    %502 = vmatpush.xpose.msra.mxu0 %v370
    %503 = vmatpush.xpose.msra.mxu0 %v354
    %504 = vmatmul.f32.gmra.mxu0 %v397
    %v505 = vpop.f32.mrf.mxu0
    %v506 = vadd.f32 %v486, %v505
    %507 = vdwg.mxu0
    %508 = vmatpush.xpose.msra.mxu0 0.0
    %509 = vmatpush.xpose.msra.mxu0 0.0
    %510 = vmatpush.xpose.msra.mxu0 0.0
    %511 = vmatpush.xpose.msra.mxu0 0.0
    %512 = vmatpush.xpose.msra.mxu0 0.0
    %513 = vmatpush.xpose.msra.mxu0 0.0
    %514 = vmatpush.xpose.msra.mxu0 0.0
    %515 = vmatpush.xpose.msra.mxu0 0.0
    %516 = vmatpush.xpose.msra.mxu0 0.0
    %517 = vmatpush.xpose.msra.mxu0 0.0
    %518 = vmatpush.xpose.msra.mxu0 0.0
    %519 = vmatpush.xpose.msra.mxu0 0.0
    %520 = vmatpush.xpose.msra.mxu0 0.0
    %521 = vmatpush.xpose.msra.mxu0 0.0
    %522 = vmatpush.xpose.msra.mxu0 %v371
    %523 = vmatpush.xpose.msra.mxu0 %v355
    %524 = vmatmul.f32.gmra.mxu0 %v398
    %v525 = vpop.f32.mrf.mxu0
    %v526 = vadd.f32 %v506, %v525
    %527 = vdwg.mxu0
    %528 = vmatpush.xpose.msra.mxu0 0.0
    %529 = vmatpush.xpose.msra.mxu0 0.0
    %530 = vmatpush.xpose.msra.mxu0 0.0
    %531 = vmatpush.xpose.msra.mxu0 0.0
    %532 = vmatpush.xpose.msra.mxu0 0.0
    %533 = vmatpush.xpose.msra.mxu0 0.0
    %534 = vmatpush.xpose.msra.mxu0 0.0
    %535 = vmatpush.xpose.msra.mxu0 0.0
    %536 = vmatpush.xpose.msra.mxu0 0.0
    %537 = vmatpush.xpose.msra.mxu0 0.0
    %538 = vmatpush.xpose.msra.mxu0 0.0
    %539 = vmatpush.xpose.msra.mxu0 0.0
    %540 = vmatpush.xpose.msra.mxu0 0.0
    %541 = vmatpush.xpose.msra.mxu0 0.0
    %542 = vmatpush.xpose.msra.mxu0 %v372
    %543 = vmatpush.xpose.msra.mxu0 %v356
    %544 = vmatmul.f32.gmra.mxu0 %v399
    %v545 = vpop.f32.mrf.mxu0
    %v546 = vadd.f32 %v526, %v545
    %547 = vdwg.mxu0
    %548 = vmatpush.xpose.msra.mxu0 0.0
    %549 = vmatpush.xpose.msra.mxu0 0.0
    %550 = vmatpush.xpose.msra.mxu0 0.0
    %551 = vmatpush.xpose.msra.mxu0 0.0
    %552 = vmatpush.xpose.msra.mxu0 0.0
    %553 = vmatpush.xpose.msra.mxu0 0.0
    %554 = vmatpush.xpose.msra.mxu0 0.0
    %555 = vmatpush.xpose.msra.mxu0 0.0
    %556 = vmatpush.xpose.msra.mxu0 0.0
    %557 = vmatpush.xpose.msra.mxu0 0.0
    %558 = vmatpush.xpose.msra.mxu0 0.0
    %559 = vmatpush.xpose.msra.mxu0 0.0
    %560 = vmatpush.xpose.msra.mxu0 0.0
    %561 = vmatpush.xpose.msra.mxu0 0.0
    %562 = vmatpush.xpose.msra.mxu0 %v373
    %563 = vmatpush.xpose.msra.mxu0 %v357
    %564 = vmatmul.f32.gmra.mxu0 %v400
    %v565 = vpop.f32.mrf.mxu0
    %v566 = vadd.f32 %v546, %v565
    %567 = vdwg.mxu0
    %568 = vmatpush.xpose.msra.mxu0 0.0
    %569 = vmatpush.xpose.msra.mxu0 0.0
    %570 = vmatpush.xpose.msra.mxu0 0.0
    %571 = vmatpush.xpose.msra.mxu0 0.0
    %572 = vmatpush.xpose.msra.mxu0 0.0
    %573 = vmatpush.xpose.msra.mxu0 0.0
    %574 = vmatpush.xpose.msra.mxu0 0.0
    %575 = vmatpush.xpose.msra.mxu0 0.0
    %576 = vmatpush.xpose.msra.mxu0 0.0
    %577 = vmatpush.xpose.msra.mxu0 0.0
    %578 = vmatpush.xpose.msra.mxu0 0.0
    %579 = vmatpush.xpose.msra.mxu0 0.0
    %580 = vmatpush.xpose.msra.mxu0 0.0
    %581 = vmatpush.xpose.msra.mxu0 0.0
    %582 = vmatpush.xpose.msra.mxu0 %v374
    %583 = vmatpush.xpose.msra.mxu0 %v358
    %584 = vmatmul.f32.gmra.mxu0 %v401
    %v585 = vpop.f32.mrf.mxu0
    %v586 = vadd.f32 %v566, %v585
    %587 = vdwg.mxu0
    %588 = vmatpush.xpose.msra.mxu0 0.0
    %589 = vmatpush.xpose.msra.mxu0 0.0
    %590 = vmatpush.xpose.msra.mxu0 0.0
    %591 = vmatpush.xpose.msra.mxu0 0.0
    %592 = vmatpush.xpose.msra.mxu0 0.0
    %593 = vmatpush.xpose.msra.mxu0 0.0
    %594 = vmatpush.xpose.msra.mxu0 0.0
    %595 = vmatpush.xpose.msra.mxu0 0.0
    %596 = vmatpush.xpose.msra.mxu0 0.0
    %597 = vmatpush.xpose.msra.mxu0 0.0
    %598 = vmatpush.xpose.msra.mxu0 0.0
    %599 = vmatpush.xpose.msra.mxu0 0.0
    %600 = vmatpush.xpose.msra.mxu0 0.0
    %601 = vmatpush.xpose.msra.mxu0 0.0
    %602 = vmatpush.xpose.msra.mxu0 %v375
    %603 = vmatpush.xpose.msra.mxu0 %v359
    %604 = vmatmul.f32.gmra.mxu0 %v404
    %v605 = vpop.f32.mrf.mxu0
    %v606 = vadd.f32 %v586, %v605
    %607 = vdwg.mxu0
    %608 = vmatpush.xpose.msra.mxu0 0.0
    %609 = vmatpush.xpose.msra.mxu0 0.0
    %610 = vmatpush.xpose.msra.mxu0 0.0
    %611 = vmatpush.xpose.msra.mxu0 0.0
    %612 = vmatpush.xpose.msra.mxu0 0.0
    %613 = vmatpush.xpose.msra.mxu0 0.0
    %614 = vmatpush.xpose.msra.mxu0 0.0
    %615 = vmatpush.xpose.msra.mxu0 0.0
    %616 = vmatpush.xpose.msra.mxu0 0.0
    %617 = vmatpush.xpose.msra.mxu0 0.0
    %618 = vmatpush.xpose.msra.mxu0 0.0
    %619 = vmatpush.xpose.msra.mxu0 0.0
    %620 = vmatpush.xpose.msra.mxu0 0.0
    %621 = vmatpush.xpose.msra.mxu0 0.0
    %622 = vmatpush.xpose.msra.mxu0 %v376
    %623 = vmatpush.xpose.msra.mxu0 %v360
    %624 = vmatmul.f32.gmra.mxu0 %v405
    %v625 = vpop.f32.mrf.mxu0
    %v626 = vadd.f32 %v606, %v625
    %627 = vdwg.mxu0
    %628 = vmatpush.xpose.msra.mxu0 0.0
    %629 = vmatpush.xpose.msra.mxu0 0.0
    %630 = vmatpush.xpose.msra.mxu0 0.0
    %631 = vmatpush.xpose.msra.mxu0 0.0
    %632 = vmatpush.xpose.msra.mxu0 0.0
    %633 = vmatpush.xpose.msra.mxu0 0.0
    %634 = vmatpush.xpose.msra.mxu0 0.0
    %635 = vmatpush.xpose.msra.mxu0 0.0
    %636 = vmatpush.xpose.msra.mxu0 0.0
    %637 = vmatpush.xpose.msra.mxu0 0.0
    %638 = vmatpush.xpose.msra.mxu0 0.0
    %639 = vmatpush.xpose.msra.mxu0 0.0
    %640 = vmatpush.xpose.msra.mxu0 0.0
    %641 = vmatpush.xpose.msra.mxu0 0.0
    %642 = vmatpush.xpose.msra.mxu0 %v377
    %643 = vmatpush.xpose.msra.mxu0 %v361
    %644 = vmatmul.f32.gmra.mxu0 %v406
    %v645 = vpop.f32.mrf.mxu0
    %v646 = vadd.f32 %v626, %v645
    %647 = vdwg.mxu0
    %648 = vmatpush.xpose.msra.mxu0 0.0
    %649 = vmatpush.xpose.msra.mxu0 0.0
    %650 = vmatpush.xpose.msra.mxu0 0.0
    %651 = vmatpush.xpose.msra.mxu0 0.0
    %652 = vmatpush.xpose.msra.mxu0 0.0
    %653 = vmatpush.xpose.msra.mxu0 0.0
    %654 = vmatpush.xpose.msra.mxu0 0.0
    %655 = vmatpush.xpose.msra.mxu0 0.0
    %656 = vmatpush.xpose.msra.mxu0 0.0
    %657 = vmatpush.xpose.msra.mxu0 0.0
    %658 = vmatpush.xpose.msra.mxu0 0.0
    %659 = vmatpush.xpose.msra.mxu0 0.0
    %660 = vmatpush.xpose.msra.mxu0 0.0
    %661 = vmatpush.xpose.msra.mxu0 0.0
    %662 = vmatpush.xpose.msra.mxu0 %v378
    %663 = vmatpush.xpose.msra.mxu0 %v362
    %664 = vmatmul.f32.gmra.mxu0 %v407
    %v665 = vpop.f32.mrf.mxu0
    %v666 = vadd.f32 %v646, %v665
    %667 = vdwg.mxu0
    %668 = vmatpush.xpose.msra.mxu0 0.0
    %669 = vmatpush.xpose.msra.mxu0 0.0
    %670 = vmatpush.xpose.msra.mxu0 0.0
    %671 = vmatpush.xpose.msra.mxu0 0.0
    %672 = vmatpush.xpose.msra.mxu0 0.0
    %673 = vmatpush.xpose.msra.mxu0 0.0
    %674 = vmatpush.xpose.msra.mxu0 0.0
    %675 = vmatpush.xpose.msra.mxu0 0.0
    %676 = vmatpush.xpose.msra.mxu0 0.0
    %677 = vmatpush.xpose.msra.mxu0 0.0
    %678 = vmatpush.xpose.msra.mxu0 0.0
    %679 = vmatpush.xpose.msra.mxu0 0.0
    %680 = vmatpush.xpose.msra.mxu0 0.0
    %681 = vmatpush.xpose.msra.mxu0 0.0
    %682 = vmatpush.xpose.msra.mxu0 %v379
    %683 = vmatpush.xpose.msra.mxu0 %v363
    %684 = vmatmul.f32.gmra.mxu0 %v408
    %v685 = vpop.f32.mrf.mxu0
    %v686 = vadd.f32 %v666, %v685
    %687 = vdwg.mxu0
    %688 = vmatpush.xpose.msra.mxu0 0.0
    %689 = vmatpush.xpose.msra.mxu0 0.0
    %690 = vmatpush.xpose.msra.mxu0 0.0
    %691 = vmatpush.xpose.msra.mxu0 0.0
    %692 = vmatpush.xpose.msra.mxu0 0.0
    %693 = vmatpush.xpose.msra.mxu0 0.0
    %694 = vmatpush.xpose.msra.mxu0 0.0
    %695 = vmatpush.xpose.msra.mxu0 0.0
    %696 = vmatpush.xpose.msra.mxu0 0.0
    %697 = vmatpush.xpose.msra.mxu0 0.0
    %698 = vmatpush.xpose.msra.mxu0 0.0
    %699 = vmatpush.xpose.msra.mxu0 0.0
    %700 = vmatpush.xpose.msra.mxu0 0.0
    %701 = vmatpush.xpose.msra.mxu0 0.0
    %702 = vmatpush.xpose.msra.mxu0 %v380
    %703 = vmatpush.xpose.msra.mxu0 %v364
    %704 = vmatmul.f32.gmra.mxu0 %v409
    %v705 = vpop.f32.mrf.mxu0
    %v706 = vadd.f32 %v686, %v705
    %707 = vdwg.mxu0
    %708 = vmatpush.xpose.msra.mxu0 0.0
    %709 = vmatpush.xpose.msra.mxu0 0.0
    %710 = vmatpush.xpose.msra.mxu0 0.0
    %711 = vmatpush.xpose.msra.mxu0 0.0
    %712 = vmatpush.xpose.msra.mxu0 0.0
    %713 = vmatpush.xpose.msra.mxu0 0.0
    %714 = vmatpush.xpose.msra.mxu0 0.0
    %715 = vmatpush.xpose.msra.mxu0 0.0
    %716 = vmatpush.xpose.msra.mxu0 0.0
    %717 = vmatpush.xpose.msra.mxu0 0.0
    %718 = vmatpush.xpose.msra.mxu0 0.0
    %719 = vmatpush.xpose.msra.mxu0 0.0
    %720 = vmatpush.xpose.msra.mxu0 0.0
    %721 = vmatpush.xpose.msra.mxu0 0.0
    %722 = vmatpush.xpose.msra.mxu0 %v381
    %723 = vmatpush.xpose.msra.mxu0 %v365
    %724 = vmatmul.f32.gmra.mxu0 %v410
    %v725 = vpop.f32.mrf.mxu0
    %v726 = vadd.f32 %v706, %v725
    %727 = vdwg.mxu0
    %728 = vmatpush.xpose.msra.mxu0 0.0
    %729 = vmatpush.xpose.msra.mxu0 0.0
    %730 = vmatpush.xpose.msra.mxu0 0.0
    %731 = vmatpush.xpose.msra.mxu0 0.0
    %732 = vmatpush.xpose.msra.mxu0 0.0
    %733 = vmatpush.xpose.msra.mxu0 0.0
    %734 = vmatpush.xpose.msra.mxu0 0.0
    %735 = vmatpush.xpose.msra.mxu0 0.0
    %736 = vmatpush.xpose.msra.mxu0 0.0
    %737 = vmatpush.xpose.msra.mxu0 0.0
    %738 = vmatpush.xpose.msra.mxu0 0.0
    %739 = vmatpush.xpose.msra.mxu0 0.0
    %740 = vmatpush.xpose.msra.mxu0 0.0
    %741 = vmatpush.xpose.msra.mxu0 0.0
    %742 = vmatpush.xpose.msra.mxu0 %v382
    %743 = vmatpush.xpose.msra.mxu0 %v366
    %744 = vmatmul.f32.gmra.mxu0 %v411
    %v745 = vpop.f32.mrf.mxu0
    %v746 = vadd.f32 %v726, %v745
    %747 = vdwg.mxu0
    %vm748 = vcmask 74752
    %749 = vst.msk [vmem:[#allocation8] sm:$0x3] %vm748, %v746
    // Predicated region
    $region26: #{my_model_forward.1} parent=1 // pred_check
      _
    $region27: #{my_model_forward.1} parent=1 // pred_check_branch
      %751 = sbr.rel (0) target = $region29
    $region28: #{my_model_forward.1} parent=1 // pred_region
      %753 = vsyncadd [#allocation7], 0
      %s755 = sshll.u32 [#allocation8], 4
      %s756 = int_to_ptr.vmem [resolvable:$true] %s755
      %s757 = sshll.u32 %s5, 4
      %s758 = int_to_ptr.hbm [resolvable:$true] %s757
      %760 = dma.vmem_to_hbm [thread:$0]  %s756, 32, %s758, [#allocation7]
    $region29: #{my_model_forward.1} parent=1 // pred_fallthru
      _
    // Predicated region
    $region30: #{my_model_forward.1} parent=1 // pred_check
      _
    $region31: #{my_model_forward.1} parent=1 // pred_check_branch
      %762 = sbr.rel (0) target = $region33
    $region32: #{my_model_forward.1} parent=1 // pred_region
      %764 = dma.done [#allocation7], 32
    $region33: #{my_model_forward.1} parent=1 // pred_fallthru
      _
    %765 = vsyncpa [#allocation6], 1
    %766 = vsyncpa [#allocation7], 1

</llo_original>
